<compile_context>
chip_gen: v6e
topology: v6e:2x2x1
jax: 0.10.0
libtpu: 0.0.40
codegen_flags: <defaults>
</compile_context>

<pallas_src>
import functools

import jax
import jax.numpy as jnp
import numpy as np
from jax.experimental import pallas as pl
from jax.experimental.pallas import tpu as pltpu


# ----------------------------------------------------------------------------
# Pallas kernel: one whole sample per grid step, all math in NCHW layout.
# ----------------------------------------------------------------------------
def se_resnet_bottleneck_kernel(
    x_ref,               # [1, C, HW]  f32 input block (also the residual identity)
    w1_ref, b1_ref,      # conv1 + folded BN1:  [F, C] bf16, [F, 1] f32
    w2_ref, b2_ref,      # conv2 + folded BN2:  [F, F] bf16, [F, 1] f32
    sew1_ref, seb1_ref,  # SE linear1 (padded): [Rp, F] bf16, [Rp, 1] f32
    sew2_ref, seb2_ref,  # SE linear2 (padded): [F, Rp] bf16, [F, 1] f32
    out_ref,             # [1, F, HW]  f32
    *, inv_hw,
):
    f32, bf16 = jnp.float32, jnp.bfloat16

    x = x_ref[0]                          # [C, HW] f32
    xb = x.astype(bf16)

    # conv1 (1x1) -> BN1 (folded) -> ReLU : [F, C] @ [C, HW] on the MXU.
    h = jnp.dot(w1_ref[...], xb, preferred_element_type=f32) + b1_ref[...]
    h = jnp.maximum(h, 0.0)

    # conv2 (1x1) -> BN2 (folded)
    t = jnp.dot(w2_ref[...], h.astype(bf16), preferred_element_type=f32) + b2_ref[...]

    # SE squeeze: global average pool over spatial = single lane reduce -> [F, 1].
    pooled = jnp.sum(t, axis=1, keepdims=True) * inv_hw

    # SE excitation: tiny MLP (mat-vec on the MXU) + sigmoid channel gate -> [F, 1].
    s = jnp.dot(sew1_ref[...], pooled.astype(bf16), preferred_element_type=f32) + seb1_ref[...]
    s = jnp.maximum(s, 0.0)
    s = jnp.dot(sew2_ref[...], s.astype(bf16), preferred_element_type=f32) + seb2_ref[...]
    s = jax.nn.sigmoid(s)

    # gate * conv-path + identity -> ReLU: single vectorized expression, one
    # contiguous lane-dense store (gate broadcasts along the HW lane axis).
    out_ref[0] = jnp.maximum(t * s + x, 0.0)


# ----------------------------------------------------------------------------
# Wrapper
# ----------------------------------------------------------------------------
def se_resnet_bottleneck_forward(x_nchw, kp, *, vmem_limit_bytes=None):
    """x_nchw: [B, C, H, W] f32 -> [B, F, H, W] f32 (module requires C == F)."""
    B, C, H, W = x_nchw.shape
    HW = H * W
    F = kp["w1"].shape[0]
    assert C == kp["w1"].shape[1]
    assert C == F, "residual add / SE gate require in_channels == filters"

    # Free reshape only (NCHW is already channel-major per sample) — no transposes.
    x = x_nchw.reshape(B, C, HW)

    params = [kp["w1"], kp["b1"], kp["w2"], kp["b2"],
              kp["sew1"], kp["seb1"], kp["sew2"], kp["seb2"]]

    kernel = functools.partial(se_resnet_bottleneck_kernel, inv_hw=1.0 / HW)
    out = pl.pallas_call(
        kernel,
        out_shape=jax.ShapeDtypeStruct((B, F, HW), jnp.float32),
        grid=(B,),
        in_specs=[pl.BlockSpec((1, C, HW), lambda i: (i, 0, 0))]
                 + [pl.BlockSpec(p.shape, lambda i: (0, 0)) for p in params],
        out_specs=pl.BlockSpec((1, F, HW), lambda i: (i, 0, 0)),
        compiler_params=pltpu.CompilerParams(
            dimension_semantics=("parallel",),
            vmem_limit_bytes=vmem_limit_bytes),
    )(x, *params)

    # Free reshape back to NCHW.
    return out.reshape(B, F, H, W)


# ----------------------------------------------------------------------------
# Deterministic synthetic parameters (PyTorch layouts) + packing for the kernel.
# ----------------------------------------------------------------------------
def init_raw_params(key, in_channels, filters, ratio=16):
    """PyTorch-layout params: conv weight [out,in] (1x1 squeezed), Linear [out,in], BN stats."""
    r = max(filters // ratio, 1)
    state = {"key": key}

    def nk():
        state["key"], sub = jax.random.split(state["key"])
        return sub

    def rn(shape, scale=0.1):
        return scale * jax.random.normal(nk(), shape, dtype=jnp.float32)

    def bn(c):
        gamma = 1.0 + rn((c,), 0.05)
        beta = rn((c,), 0.05)
        mean = rn((c,), 0.05)
        var = 1.0 + 0.1 * jax.random.uniform(nk(), (c,), dtype=jnp.float32)
        return (gamma, beta, mean, var)

    return {
        "conv1_w": rn((filters, in_channels)), "conv1_b": rn((filters,)), "bn1": bn(filters),
        "conv2_w": rn((filters, filters)),     "conv2_b": rn((filters,)), "bn2": bn(filters),
        "se_w1": rn((r, filters)), "se_b1": rn((r,)),
        "se_w2": rn((filters, r)), "se_b2": rn((filters,)),
    }


def pack_params(raw, r_pad=8, eps=1e-5):
    """Fold BN into the convs (keeping [out, in] orientation for W @ X), zero-pad the SE
    bottleneck dim to a sublane multiple, cast matmul weights to bf16 (biases stay f32
    as [out, 1] columns for lane-broadcast)."""
    def fold(w, b, bn_stats):
        gamma, beta, mean, var = bn_stats
        s = gamma / jnp.sqrt(var + eps)
        w_folded = w * s[:, None]                     # row f scaled by s[f]
        b_folded = b * s + (beta - mean * s)
        return w_folded.astype(jnp.bfloat16), b_folded.reshape(-1, 1)

    w1, b1 = fold(raw["conv1_w"], raw["conv1_b"], raw["bn1"])
    w2, b2 = fold(raw["conv2_w"], raw["conv2_b"], raw["bn2"])

    r, f = raw["se_w1"].shape
    rp = max(r_pad, r)
    sew1 = jnp.zeros((rp, f), jnp.float32).at[:r, :].set(raw["se_w1"])
    seb1 = jnp.zeros((rp, 1), jnp.float32).at[:r, 0].set(raw["se_b1"])
    sew2 = jnp.zeros((f, rp), jnp.float32).at[:, :r].set(raw["se_w2"])
    seb2 = raw["se_b2"].reshape(f, 1)

    return {"w1": w1, "b1": b1, "w2": w2, "b2": b2,
            "sew1": sew1.astype(jnp.bfloat16), "seb1": seb1,
            "sew2": sew2.astype(jnp.bfloat16), "seb2": seb2}


# ----------------------------------------------------------------------------
# Pure-JAX f32 reference: direct transcription of the PyTorch forward (eval-mode BN).
# ----------------------------------------------------------------------------
def reference_forward(x, raw, eps=1e-5):
    def conv1x1(h, w, b):
        return jnp.einsum("bchw,fc->bfhw", h, w) + b[None, :, None, None]

    def bn(h, stats):
        gamma, beta, mean, var = stats
        s = gamma / jnp.sqrt(var + eps)
        return h * s[None, :, None, None] + (beta - mean * s)[None, :, None, None]

    identity = x
    h = jnp.maximum(bn(conv1x1(x, raw["conv1_w"], raw["conv1_b"]), raw["bn1"]), 0.0)
    h = bn(conv1x1(h, raw["conv2_w"], raw["conv2_b"]), raw["bn2"])
    pooled = jnp.mean(h, axis=(2, 3))                                   # AvgPool2d + Flatten
    s = jnp.maximum(pooled @ raw["se_w1"].T + raw["se_b1"], 0.0)        # linear1 + ReLU
    s = jax.nn.sigmoid(s @ raw["se_w2"].T + raw["se_b2"])               # linear2 + Sigmoid
    h = h * s[:, :, None, None]
    return jnp.maximum(h + identity, 0.0)


if __name__ == "__main__":
    # The module only type-checks when filters == in_channels (conv2d2 takes in_channels
    # input features but runs on the filters-channel tensor, and the residual add needs
    # matching channels), and ratio=16 needs filters >= 16. Use C = F = 32, H = W = 16
    # (HW = 256 puts a full 128-lane multiple on the lane axis), B = 4 grid steps.
    B, H, W = 4, 16, 16
    in_channels = filters = 32
    ratio = 16

    key = jax.random.PRNGKey(0)
    kx, kp = jax.random.split(key)
    x = jax.random.normal(kx, (B, in_channels, H, W), dtype=jnp.float32)

    raw = init_raw_params(kp, in_channels, filters, ratio=ratio)
    packed = pack_params(raw)

    out = jax.block_until_ready(se_resnet_bottleneck_forward(x, packed))
    ref = jax.block_until_ready(reference_forward(x, raw))

    assert out.shape == (B, filters, H, W)
    # Kernel uses bf16 matmul operands (f32 accumulation) vs the pure-f32 reference,
    # so the tolerance is set to the bf16 rounding level.
    max_err = float(np.max(np.abs(np.asarray(out) - np.asarray(ref))))
    assert np.allclose(np.asarray(out), np.asarray(ref), rtol=3e-2, atol=3e-2), max_err
    print("KERNEL_OK")
</pallas_src>

<mosaic_0001>
module attributes {stable_mosaic.version = 11 : i64} {
  func.func @se_resnet_bottleneck_kernel(%arg0: i32, %arg1: memref<1x32x256xf32, #tpu.memory_space<vmem>>, %arg2: memref<32x32xbf16, #tpu.memory_space<vmem>>, %arg3: memref<32x1xf32, #tpu.memory_space<vmem>>, %arg4: memref<32x32xbf16, #tpu.memory_space<vmem>>, %arg5: memref<32x1xf32, #tpu.memory_space<vmem>>, %arg6: memref<8x32xbf16, #tpu.memory_space<vmem>>, %arg7: memref<8x1xf32, #tpu.memory_space<vmem>>, %arg8: memref<32x8xbf16, #tpu.memory_space<vmem>>, %arg9: memref<32x1xf32, #tpu.memory_space<vmem>>, %arg10: memref<1x32x256xf32, #tpu.memory_space<vmem>>) attributes {dimension_semantics = [#tpu.dimension_semantics<parallel>], iteration_bounds = array<i64: 4>, scalar_prefetch = 0 : i64, scratch_operands = 0 : i64, tpu.core_type = #tpu.core_type<tc>, window_params = [{transform_indices = @transform_0, window_bounds = array<i64: 1, 32, 256>}, {pipeline_mode = #tpu.pipeline_mode<synchronous>, transform_indices = @transform_1, window_bounds = array<i64: 32, 32>}, {pipeline_mode = #tpu.pipeline_mode<synchronous>, transform_indices = @transform_2, window_bounds = array<i64: 32, 1>}, {pipeline_mode = #tpu.pipeline_mode<synchronous>, transform_indices = @transform_3, window_bounds = array<i64: 32, 32>}, {pipeline_mode = #tpu.pipeline_mode<synchronous>, transform_indices = @transform_4, window_bounds = array<i64: 32, 1>}, {pipeline_mode = #tpu.pipeline_mode<synchronous>, transform_indices = @transform_5, window_bounds = array<i64: 8, 32>}, {pipeline_mode = #tpu.pipeline_mode<synchronous>, transform_indices = @transform_6, window_bounds = array<i64: 8, 1>}, {pipeline_mode = #tpu.pipeline_mode<synchronous>, transform_indices = @transform_7, window_bounds = array<i64: 32, 8>}, {pipeline_mode = #tpu.pipeline_mode<synchronous>, transform_indices = @transform_8, window_bounds = array<i64: 32, 1>}, {transform_indices = @transform_9, window_bounds = array<i64: 1, 32, 256>}]} {
    %c0 = arith.constant 0 : index
    %c0_0 = arith.constant 0 : index
    %c0_1 = arith.constant 0 : index
    %0 = vector.load %arg1[%c0, %c0_0, %c0_1] : memref<1x32x256xf32, #tpu.memory_space<vmem>>, vector<1x32x256xf32>
    %1 = vector.shape_cast %0 : vector<1x32x256xf32> to vector<32x256xf32>
    %2 = arith.truncf %1 : vector<32x256xf32> to vector<32x256xbf16>
    %c0_2 = arith.constant 0 : index
    %c0_3 = arith.constant 0 : index
    %3 = vector.load %arg2[%c0_2, %c0_3] : memref<32x32xbf16, #tpu.memory_space<vmem>>, vector<32x32xbf16>
    %cst = arith.constant dense<0.000000e+00> : vector<32x256xf32>
    %4 = tpu.matmul %3, %2, %cst {dimension_numbers = #tpu.dot_dimension_numbers<[1], [0], [0], [1], [0, 0, 1, 1], [], []>} : vector<32x32xbf16>, vector<32x256xbf16>, vector<32x256xf32> -> vector<32x256xf32>
    %c0_4 = arith.constant 0 : index
    %c0_5 = arith.constant 0 : index
    %5 = vector.load %arg3[%c0_4, %c0_5] : memref<32x1xf32, #tpu.memory_space<vmem>>, vector<32x1xf32>
    %6 = vector.broadcast %5 : vector<32x1xf32> to vector<32x256xf32>
    %7 = arith.addf %4, %6 : vector<32x256xf32>
    %cst_6 = arith.constant 0.000000e+00 : f32
    %8 = vector.broadcast %cst_6 : f32 to vector<32x256xf32>
    %9 = arith.maximumf %7, %8 : vector<32x256xf32>
    %c0_7 = arith.constant 0 : index
    %c0_8 = arith.constant 0 : index
    %10 = vector.load %arg4[%c0_7, %c0_8] : memref<32x32xbf16, #tpu.memory_space<vmem>>, vector<32x32xbf16>
    %11 = arith.truncf %9 : vector<32x256xf32> to vector<32x256xbf16>
    %cst_9 = arith.constant dense<0.000000e+00> : vector<32x256xf32>
    %12 = tpu.matmul %10, %11, %cst_9 {dimension_numbers = #tpu.dot_dimension_numbers<[1], [0], [0], [1], [0, 0, 1, 1], [], []>} : vector<32x32xbf16>, vector<32x256xbf16>, vector<32x256xf32> -> vector<32x256xf32>
    %c0_10 = arith.constant 0 : index
    %c0_11 = arith.constant 0 : index
    %13 = vector.load %arg5[%c0_10, %c0_11] : memref<32x1xf32, #tpu.memory_space<vmem>>, vector<32x1xf32>
    %14 = vector.broadcast %13 : vector<32x1xf32> to vector<32x256xf32>
    %15 = arith.addf %12, %14 : vector<32x256xf32>
    %cst_12 = arith.constant dense<0.000000e+00> : vector<32xf32>
    %16 = vector.multi_reduction <add>, %15, %cst_12 [1] : vector<32x256xf32> to vector<32xf32>
    %17 = vector.shape_cast %16 : vector<32xf32> to vector<32x1xf32>
    %cst_13 = arith.constant 3.906250e-03 : f32
    %18 = vector.broadcast %cst_13 : f32 to vector<32x1xf32>
    %19 = arith.mulf %17, %18 : vector<32x1xf32>
    %c0_14 = arith.constant 0 : index
    %c0_15 = arith.constant 0 : index
    %20 = vector.load %arg6[%c0_14, %c0_15] : memref<8x32xbf16, #tpu.memory_space<vmem>>, vector<8x32xbf16>
    %21 = arith.truncf %19 : vector<32x1xf32> to vector<32x1xbf16>
    %cst_16 = arith.constant dense<0.000000e+00> : vector<8x1xf32>
    %22 = tpu.matmul %20, %21, %cst_16 {dimension_numbers = #tpu.dot_dimension_numbers<[1], [0], [0], [1], [0, 0, 1, 1], [], []>} : vector<8x32xbf16>, vector<32x1xbf16>, vector<8x1xf32> -> vector<8x1xf32>
    %c0_17 = arith.constant 0 : index
    %c0_18 = arith.constant 0 : index
    %23 = vector.load %arg7[%c0_17, %c0_18] : memref<8x1xf32, #tpu.memory_space<vmem>>, vector<8x1xf32>
    %24 = arith.addf %22, %23 : vector<8x1xf32>
    %cst_19 = arith.constant 0.000000e+00 : f32
    %25 = vector.broadcast %cst_19 : f32 to vector<8x1xf32>
    %26 = arith.maximumf %24, %25 : vector<8x1xf32>
    %c0_20 = arith.constant 0 : index
    %c0_21 = arith.constant 0 : index
    %27 = vector.load %arg8[%c0_20, %c0_21] : memref<32x8xbf16, #tpu.memory_space<vmem>>, vector<32x8xbf16>
    %28 = arith.truncf %26 : vector<8x1xf32> to vector<8x1xbf16>
    %cst_22 = arith.constant dense<0.000000e+00> : vector<32x1xf32>
    %29 = tpu.matmul %27, %28, %cst_22 {dimension_numbers = #tpu.dot_dimension_numbers<[1], [0], [0], [1], [0, 0, 1, 1], [], []>} : vector<32x8xbf16>, vector<8x1xbf16>, vector<32x1xf32> -> vector<32x1xf32>
    %c0_23 = arith.constant 0 : index
    %c0_24 = arith.constant 0 : index
    %30 = vector.load %arg9[%c0_23, %c0_24] : memref<32x1xf32, #tpu.memory_space<vmem>>, vector<32x1xf32>
    %31 = arith.addf %29, %30 : vector<32x1xf32>
    %32 = arith.negf %31 : vector<32x1xf32>
    %33 = math.exp %32 : vector<32x1xf32>
    %cst_25 = arith.constant 1.000000e+00 : f32
    %34 = vector.broadcast %cst_25 : f32 to vector<32x1xf32>
    %35 = arith.addf %34, %33 : vector<32x1xf32>
    %36 = arith.divf %34, %35 : vector<32x1xf32>
    %37 = vector.broadcast %36 : vector<32x1xf32> to vector<32x256xf32>
    %38 = arith.mulf %15, %37 : vector<32x256xf32>
    %39 = arith.addf %38, %1 : vector<32x256xf32>
    %cst_26 = arith.constant 0.000000e+00 : f32
    %40 = vector.broadcast %cst_26 : f32 to vector<32x256xf32>
    %41 = arith.maximumf %39, %40 : vector<32x256xf32>
    %c0_27 = arith.constant 0 : index
    %c0_28 = arith.constant 0 : index
    %c0_29 = arith.constant 0 : index
    %42 = vector.load %arg10[%c0_27, %c0_28, %c0_29] : memref<1x32x256xf32, #tpu.memory_space<vmem>>, vector<1x32x256xf32>
    %43 = vector.shape_cast %42 : vector<1x32x256xf32> to vector<32x256xf32>
    %44 = vector.shape_cast %41 : vector<32x256xf32> to vector<1x32x256xf32>
    tpu.vector_store %arg10[%c0_27, %c0_28, %c0_29], %44 {strides = array<i32>} : memref<1x32x256xf32, #tpu.memory_space<vmem>>, vector<1x32x256xf32>,
    return
  }
  func.func @transform_0(%arg0: i32) -> (i32, i32, i32) {
    %c0_i32 = arith.constant 0 : i32
    %c0_i32_0 = arith.constant 0 : i32
    %c0_i32_1 = arith.constant 0 : i32
    return %arg0, %c0_i32, %c0_i32_0 : i32, i32, i32
  }
  func.func @transform_1(%arg0: i32) -> (i32, i32) {
    %c0_i32 = arith.constant 0 : i32
    %c0_i32_0 = arith.constant 0 : i32
    %c0_i32_1 = arith.constant 0 : i32
    return %c0_i32, %c0_i32_0 : i32, i32
  }
  func.func @transform_2(%arg0: i32) -> (i32, i32) {
    %c0_i32 = arith.constant 0 : i32
    %c0_i32_0 = arith.constant 0 : i32
    %c0_i32_1 = arith.constant 0 : i32
    return %c0_i32, %c0_i32_0 : i32, i32
  }
  func.func @transform_3(%arg0: i32) -> (i32, i32) {
    %c0_i32 = arith.constant 0 : i32
    %c0_i32_0 = arith.constant 0 : i32
    %c0_i32_1 = arith.constant 0 : i32
    return %c0_i32, %c0_i32_0 : i32, i32
  }
  func.func @transform_4(%arg0: i32) -> (i32, i32) {
    %c0_i32 = arith.constant 0 : i32
    %c0_i32_0 = arith.constant 0 : i32
    %c0_i32_1 = arith.constant 0 : i32
    return %c0_i32, %c0_i32_0 : i32, i32
  }
  func.func @transform_5(%arg0: i32) -> (i32, i32) {
    %c0_i32 = arith.constant 0 : i32
    %c0_i32_0 = arith.constant 0 : i32
    %c0_i32_1 = arith.constant 0 : i32
    return %c0_i32, %c0_i32_0 : i32, i32
  }
  func.func @transform_6(%arg0: i32) -> (i32, i32) {
    %c0_i32 = arith.constant 0 : i32
    %c0_i32_0 = arith.constant 0 : i32
    %c0_i32_1 = arith.constant 0 : i32
    return %c0_i32, %c0_i32_0 : i32, i32
  }
  func.func @transform_7(%arg0: i32) -> (i32, i32) {
    %c0_i32 = arith.constant 0 : i32
    %c0_i32_0 = arith.constant 0 : i32
    %c0_i32_1 = arith.constant 0 : i32
    return %c0_i32, %c0_i32_0 : i32, i32
  }
  func.func @transform_8(%arg0: i32) -> (i32, i32) {
    %c0_i32 = arith.constant 0 : i32
    %c0_i32_0 = arith.constant 0 : i32
    %c0_i32_1 = arith.constant 0 : i32
    return %c0_i32, %c0_i32_0 : i32, i32
  }
  func.func @transform_9(%arg0: i32) -> (i32, i32, i32) {
    %c0_i32 = arith.constant 0 : i32
    %c0_i32_0 = arith.constant 0 : i32
    %c0_i32_1 = arith.constant 0 : i32
    return %arg0, %c0_i32, %c0_i32_0 : i32, i32, i32
  }
}

</mosaic_0001>

<llo_original>
// kernel: tpu_custom_call.1
$region0: #{tpu_custom_call.1}
  #allocation0 [shape = 'u32[]', space=smem, size = 0x4, offset = 0x4, fixed_abs, tag = 'smem constant byte address 0x4 - core index']
  #allocation1 [shape = 'u32[144,128]{1,0:T(1,128)}', space=vmem, size = 0x12000, scoped, tag = 'internal scratch']
  %s0 = inlined_call_operand.hbm [shape: f32[4,32,256], index: 0, kind: input, shape index: {}]
  %s1 = inlined_call_operand.vmem [shape: bf16[32,32], index: 1, kind: input, shape index: {}]
  %s2 = inlined_call_operand.vmem [shape: f32[32,1], index: 2, kind: input, shape index: {}]
  %s3 = inlined_call_operand.vmem [shape: bf16[32,32], index: 3, kind: input, shape index: {}]
  %s4 = inlined_call_operand.vmem [shape: f32[32,1], index: 4, kind: input, shape index: {}]
  %s5 = inlined_call_operand.vmem [shape: bf16[8,32], index: 5, kind: input, shape index: {}]
  %s6 = inlined_call_operand.vmem [shape: f32[8,1], index: 6, kind: input, shape index: {}]
  %s7 = inlined_call_operand.vmem [shape: bf16[32,8], index: 7, kind: input, shape index: {}]
  %s8 = inlined_call_operand.vmem [shape: f32[32,1], index: 8, kind: input, shape index: {}]
  %s9 = inlined_call_operand.hbm [shape: f32[4,32,256], index: 9, kind: output, shape index: {}]
  %s10 = sld [smem:[#allocation0]]
  $region73: #{tpu_custom_call.1} parent=0
    _
  %s12 = ssub.s32 1, %s10
  %s13 = scalar_select 0, %s12, %s10
  $region1: #{tpu_custom_call.1} parent=0
    #allocation2 [shape = 'u8[65536]{0}', space=vmem, size = 0x10000, scoped, tag = 'input window, operand 0']
    #allocation3 [shape = 's32[2]{0}', space=sflag, size = 0x8, scoped, tag = 'scoped memory for tpu_custom_call.1']
    #allocation4 [shape = 's32[2]{0}', space=sflag, size = 0x8, scoped, tag = 'scoped memory for tpu_custom_call.1']
    #allocation5 [shape = 'u8[65536]{0}', space=vmem, size = 0x10000, scoped, tag = 'output window, operand 0']
    %14 = vsyncpa [#allocation3], 0
    %s15 = scalar_lea.sflag [#allocation3], 1
    %16 = vsyncpa %s15, 0
    %17 = vsyncpa [#allocation4], 0
    %s18 = scalar_lea.sflag [#allocation4], 1
    %19 = vsyncpa %s18, 0
    loop: start=0, step=1, limit=6
    $region2: #{tpu_custom_call.1} parent=1 // loop_pre_header
      _
    $region3: #{tpu_custom_call.1} parent=1 // loop_header
      %s21 = sphi 0, %s25
      %p22 = scmp.ge.s32.totalorder %s21, 6
      %s31 = sphi 0, %s33
      %s34 = sphi 0, %s31
      %s35 = sphi 0, %s34
      %s51 = sphi 0, %s35
      %s55 = sphi 0, %s55
      %s57 = sphi 0, %s55
      %s58 = sphi 0, %s57
      %s72 = sphi 0, %s58
      %s76 = sphi 0, %s76
      %s78 = sphi 0, %s76
      %s79 = sphi 0, %s78
      %s93 = sphi 0, %s79
      %s97 = sphi 0, %s97
      %s99 = sphi 0, %s97
      %s100 = sphi 0, %s99
      %s114 = sphi 0, %s100
      %s118 = sphi 0, %s118
      %s120 = sphi 0, %s118
      %s121 = sphi 0, %s120
      %s135 = sphi 0, %s121
      %s139 = sphi 0, %s139
      %s141 = sphi 0, %s139
      %s142 = sphi 0, %s141
      %s156 = sphi 0, %s142
      %s160 = sphi 0, %s160
      %s162 = sphi 0, %s160
      %s163 = sphi 0, %s162
      %s177 = sphi 0, %s163
      %s181 = sphi 0, %s181
      %s183 = sphi 0, %s181
      %s184 = sphi 0, %s183
      %s198 = sphi 0, %s184
      %s202 = sphi 0, %s202
      %s204 = sphi 0, %s202
      %s205 = sphi 0, %s204
      %s219 = sphi 0, %s205
      %s225 = sphi 0, %s227
      %s228 = sphi 0, %s225
      %s229 = sphi 0, %s228
      %s245 = sphi 0, %s229
    $region4: #{tpu_custom_call.1} parent=1 // loop_header_branch
      %24 = sbr.rel (%p22) target = $region8
    $region5: #{tpu_custom_call.1} parent=1 // loop_body
      %s26 = ssub.s32 %s21, 1
      %s27 = ssub.s32 %s21, 2
      %s28 = sadd.s32 %s21, 1
      %s29 = ssub.s32 %s21, %s28
      %p30 = scmp.eq.s32.totalorder %s29, 0
      %s32 = sadd.s32 %s31, 1
      %s33 = scalar_select %p30, %s31, %s32
      %p36 = pneg %p30
      %p37 = scmp.eq.s32.totalorder %s21, 3
      %p38 = por %p36, %p37
      %p39 = scmp.ne.s32.totalorder %s31, %s34
      %p40 = scmp.eq.s32.totalorder %s21, 0
      %p41 = por %p39, %p40
      %p42 = scmp.ne.s32.totalorder %s31, %s34
      %p43 = scmp.eq.s32.totalorder %s26, 3
      %p44 = por %p42, %p43
      %p45 = scmp.ne.s32.totalorder %s34, %s35
      %p46 = scmp.eq.s32.totalorder %s26, 0
      %p47 = por %p45, %p46
      %p48 = scmp.ne.s32.totalorder %s34, %s35
      %p49 = scmp.eq.s32.totalorder %s27, 3
      %p50 = por %p48, %p49
      %p52 = scmp.ne.s32.totalorder %s35, %s51
      %p53 = scmp.eq.s32.totalorder %s27, 0
      %p54 = por %p52, %p53
      %s56 = sadd.s32 %s55, 1
      %p59 = scmp.eq.s32.totalorder %s21, 3
      %p60 = scmp.ne.s32.totalorder %s55, %s57
      %p61 = scmp.eq.s32.totalorder %s21, 0
      %p62 = por %p60, %p61
      %p63 = scmp.ne.s32.totalorder %s55, %s57
      %p64 = scmp.eq.s32.totalorder %s26, 3
      %p65 = por %p63, %p64
      %p66 = scmp.ne.s32.totalorder %s57, %s58
      %p67 = scmp.eq.s32.totalorder %s26, 0
      %p68 = por %p66, %p67
      %p69 = scmp.ne.s32.totalorder %s57, %s58
      %p70 = scmp.eq.s32.totalorder %s27, 3
      %p71 = por %p69, %p70
      %p73 = scmp.ne.s32.totalorder %s58, %s72
      %p74 = scmp.eq.s32.totalorder %s27, 0
      %p75 = por %p73, %p74
      %s77 = sadd.s32 %s76, 1
      %p80 = scmp.eq.s32.totalorder %s21, 3
      %p81 = scmp.ne.s32.totalorder %s76, %s78
      %p82 = scmp.eq.s32.totalorder %s21, 0
      %p83 = por %p81, %p82
      %p84 = scmp.ne.s32.totalorder %s76, %s78
      %p85 = scmp.eq.s32.totalorder %s26, 3
      %p86 = por %p84, %p85
      %p87 = scmp.ne.s32.totalorder %s78, %s79
      %p88 = scmp.eq.s32.totalorder %s26, 0
      %p89 = por %p87, %p88
      %p90 = scmp.ne.s32.totalorder %s78, %s79
      %p91 = scmp.eq.s32.totalorder %s27, 3
      %p92 = por %p90, %p91
      %p94 = scmp.ne.s32.totalorder %s79, %s93
      %p95 = scmp.eq.s32.totalorder %s27, 0
      %p96 = por %p94, %p95
      %s98 = sadd.s32 %s97, 1
      %p101 = scmp.eq.s32.totalorder %s21, 3
      %p102 = scmp.ne.s32.totalorder %s97, %s99
      %p103 = scmp.eq.s32.totalorder %s21, 0
      %p104 = por %p102, %p103
      %p105 = scmp.ne.s32.totalorder %s97, %s99
      %p106 = scmp.eq.s32.totalorder %s26, 3
      %p107 = por %p105, %p106
      %p108 = scmp.ne.s32.totalorder %s99, %s100
      %p109 = scmp.eq.s32.totalorder %s26, 0
      %p110 = por %p108, %p109
      %p111 = scmp.ne.s32.totalorder %s99, %s100
      %p112 = scmp.eq.s32.totalorder %s27, 3
      %p113 = por %p111, %p112
      %p115 = scmp.ne.s32.totalorder %s100, %s114
      %p116 = scmp.eq.s32.totalorder %s27, 0
      %p117 = por %p115, %p116
      %s119 = sadd.s32 %s118, 1
      %p122 = scmp.eq.s32.totalorder %s21, 3
      %p123 = scmp.ne.s32.totalorder %s118, %s120
      %p124 = scmp.eq.s32.totalorder %s21, 0
      %p125 = por %p123, %p124
      %p126 = scmp.ne.s32.totalorder %s118, %s120
      %p127 = scmp.eq.s32.totalorder %s26, 3
      %p128 = por %p126, %p127
      %p129 = scmp.ne.s32.totalorder %s120, %s121
      %p130 = scmp.eq.s32.totalorder %s26, 0
      %p131 = por %p129, %p130
      %p132 = scmp.ne.s32.totalorder %s120, %s121
      %p133 = scmp.eq.s32.totalorder %s27, 3
      %p134 = por %p132, %p133
      %p136 = scmp.ne.s32.totalorder %s121, %s135
      %p137 = scmp.eq.s32.totalorder %s27, 0
      %p138 = por %p136, %p137
      %s140 = sadd.s32 %s139, 1
      %p143 = scmp.eq.s32.totalorder %s21, 3
      %p144 = scmp.ne.s32.totalorder %s139, %s141
      %p145 = scmp.eq.s32.totalorder %s21, 0
      %p146 = por %p144, %p145
      %p147 = scmp.ne.s32.totalorder %s139, %s141
      %p148 = scmp.eq.s32.totalorder %s26, 3
      %p149 = por %p147, %p148
      %p150 = scmp.ne.s32.totalorder %s141, %s142
      %p151 = scmp.eq.s32.totalorder %s26, 0
      %p152 = por %p150, %p151
      %p153 = scmp.ne.s32.totalorder %s141, %s142
      %p154 = scmp.eq.s32.totalorder %s27, 3
      %p155 = por %p153, %p154
      %p157 = scmp.ne.s32.totalorder %s142, %s156
      %p158 = scmp.eq.s32.totalorder %s27, 0
      %p159 = por %p157, %p158
      %s161 = sadd.s32 %s160, 1
      %p164 = scmp.eq.s32.totalorder %s21, 3
      %p165 = scmp.ne.s32.totalorder %s160, %s162
      %p166 = scmp.eq.s32.totalorder %s21, 0
      %p167 = por %p165, %p166
      %p168 = scmp.ne.s32.totalorder %s160, %s162
      %p169 = scmp.eq.s32.totalorder %s26, 3
      %p170 = por %p168, %p169
      %p171 = scmp.ne.s32.totalorder %s162, %s163
      %p172 = scmp.eq.s32.totalorder %s26, 0
      %p173 = por %p171, %p172
      %p174 = scmp.ne.s32.totalorder %s162, %s163
      %p175 = scmp.eq.s32.totalorder %s27, 3
      %p176 = por %p174, %p175
      %p178 = scmp.ne.s32.totalorder %s163, %s177
      %p179 = scmp.eq.s32.totalorder %s27, 0
      %p180 = por %p178, %p179
      %s182 = sadd.s32 %s181, 1
      %p185 = scmp.eq.s32.totalorder %s21, 3
      %p186 = scmp.ne.s32.totalorder %s181, %s183
      %p187 = scmp.eq.s32.totalorder %s21, 0
      %p188 = por %p186, %p187
      %p189 = scmp.ne.s32.totalorder %s181, %s183
      %p190 = scmp.eq.s32.totalorder %s26, 3
      %p191 = por %p189, %p190
      %p192 = scmp.ne.s32.totalorder %s183, %s184
      %p193 = scmp.eq.s32.totalorder %s26, 0
      %p194 = por %p192, %p193
      %p195 = scmp.ne.s32.totalorder %s183, %s184
      %p196 = scmp.eq.s32.totalorder %s27, 3
      %p197 = por %p195, %p196
      %p199 = scmp.ne.s32.totalorder %s184, %s198
      %p200 = scmp.eq.s32.totalorder %s27, 0
      %p201 = por %p199, %p200
      %s203 = sadd.s32 %s202, 1
      %p206 = scmp.eq.s32.totalorder %s21, 3
      %p207 = scmp.ne.s32.totalorder %s202, %s204
      %p208 = scmp.eq.s32.totalorder %s21, 0
      %p209 = por %p207, %p208
      %p210 = scmp.ne.s32.totalorder %s202, %s204
      %p211 = scmp.eq.s32.totalorder %s26, 3
      %p212 = por %p210, %p211
      %p213 = scmp.ne.s32.totalorder %s204, %s205
      %p214 = scmp.eq.s32.totalorder %s26, 0
      %p215 = por %p213, %p214
      %p216 = scmp.ne.s32.totalorder %s204, %s205
      %p217 = scmp.eq.s32.totalorder %s27, 3
      %p218 = por %p216, %p217
      %p220 = scmp.ne.s32.totalorder %s205, %s219
      %p221 = scmp.eq.s32.totalorder %s27, 0
      %p222 = por %p220, %p221
      %s223 = ssub.s32 %s21, %s28
      %p224 = scmp.eq.s32.totalorder %s223, 0
      %s226 = sadd.s32 %s225, 1
      %s227 = scalar_select %p224, %s225, %s226
      %p230 = pneg %p224
      %p231 = scmp.eq.s32.totalorder %s21, 3
      %p232 = por %p230, %p231
      %p233 = scmp.ne.s32.totalorder %s225, %s228
      %p234 = scmp.eq.s32.totalorder %s21, 0
      %p235 = por %p233, %p234
      %p236 = scmp.ne.s32.totalorder %s225, %s228
      %p237 = scmp.eq.s32.totalorder %s26, 3
      %p238 = por %p236, %p237
      %p239 = scmp.ne.s32.totalorder %s228, %s229
      %p240 = scmp.eq.s32.totalorder %s26, 0
      %p241 = por %p239, %p240
      %p242 = scmp.ne.s32.totalorder %s228, %s229
      %p243 = scmp.eq.s32.totalorder %s27, 3
      %p244 = por %p242, %p243
      %p246 = scmp.ne.s32.totalorder %s229, %s245
      %p247 = scmp.eq.s32.totalorder %s27, 0
      %p248 = por %p246, %p247
      %p249 = scmp.le.s32.totalorder 1, %s21
      %p250 = scmp.lt.s32.totalorder %s21, 5
      %p251 = pnand %p249, %p250
      %p252 = pneg %p251
      // Predicated region
      $region9: #{tpu_custom_call.1} parent=5 // pred_check
        _
      $region10: #{tpu_custom_call.1} parent=5 // pred_check_branch
        %254 = sbr.rel (%p251) target = $region12
      $region11: #{tpu_custom_call.1} parent=5 // pred_region
        %s255 = ssub.s32 %s21, 1
        // Predicated region
        $region13: #{tpu_custom_call.1} parent=11 // pred_check
          %p256 = pneg %p68
        $region14: #{tpu_custom_call.1} parent=11 // pred_check_branch
          %258 = sbr.rel (%p256) target = $region16
        $region15: #{tpu_custom_call.1} parent=11 // pred_region
          _
        $region16: #{tpu_custom_call.1} parent=11 // pred_fallthru
          _
        // Predicated region
        $region17: #{tpu_custom_call.1} parent=11 // pred_check
          %p259 = pneg %p89
        $region18: #{tpu_custom_call.1} parent=11 // pred_check_branch
          %261 = sbr.rel (%p259) target = $region20
        $region19: #{tpu_custom_call.1} parent=11 // pred_region
          _
        $region20: #{tpu_custom_call.1} parent=11 // pred_fallthru
          _
        // Predicated region
        $region21: #{tpu_custom_call.1} parent=11 // pred_check
          %p262 = pneg %p110
        $region22: #{tpu_custom_call.1} parent=11 // pred_check_branch
          %264 = sbr.rel (%p262) target = $region24
        $region23: #{tpu_custom_call.1} parent=11 // pred_region
          _
        $region24: #{tpu_custom_call.1} parent=11 // pred_fallthru
          _
        // Predicated region
        $region25: #{tpu_custom_call.1} parent=11 // pred_check
          %p265 = pneg %p131
        $region26: #{tpu_custom_call.1} parent=11 // pred_check_branch
          %267 = sbr.rel (%p265) target = $region28
        $region27: #{tpu_custom_call.1} parent=11 // pred_region
          _
        $region28: #{tpu_custom_call.1} parent=11 // pred_fallthru
          _
        // Predicated region
        $region29: #{tpu_custom_call.1} parent=11 // pred_check
          %p268 = pneg %p152
        $region30: #{tpu_custom_call.1} parent=11 // pred_check_branch
          %270 = sbr.rel (%p268) target = $region32
        $region31: #{tpu_custom_call.1} parent=11 // pred_region
          _
        $region32: #{tpu_custom_call.1} parent=11 // pred_fallthru
          _
        // Predicated region
        $region33: #{tpu_custom_call.1} parent=11 // pred_check
          %p271 = pneg %p173
        $region34: #{tpu_custom_call.1} parent=11 // pred_check_branch
          %273 = sbr.rel (%p271) target = $region36
        $region35: #{tpu_custom_call.1} parent=11 // pred_region
          _
        $region36: #{tpu_custom_call.1} parent=11 // pred_fallthru
          _
        // Predicated region
        $region37: #{tpu_custom_call.1} parent=11 // pred_check
          %p274 = pneg %p194
        $region38: #{tpu_custom_call.1} parent=11 // pred_check_branch
          %276 = sbr.rel (%p274) target = $region40
        $region39: #{tpu_custom_call.1} parent=11 // pred_region
          _
        $region40: #{tpu_custom_call.1} parent=11 // pred_fallthru
          _
        // Predicated region
        $region41: #{tpu_custom_call.1} parent=11 // pred_check
          %p277 = pneg %p215
        $region42: #{tpu_custom_call.1} parent=11 // pred_check_branch
          %279 = sbr.rel (%p277) target = $region44
        $region43: #{tpu_custom_call.1} parent=11 // pred_region
          _
        $region44: #{tpu_custom_call.1} parent=11 // pred_fallthru
          _
      $region12: #{tpu_custom_call.1} parent=5 // pred_fallthru
        _
      %p280 = scmp.lt.s32.totalorder %s21, 4
      // Predicated region
      $region45: #{tpu_custom_call.1} parent=5 // pred_check
        %p281 = pneg %p280
      $region46: #{tpu_custom_call.1} parent=5 // pred_check_branch
        %283 = sbr.rel (%p281) target = $region48
      $region47: #{tpu_custom_call.1} parent=5 // pred_region
        // Predicated region
        $region49: #{tpu_custom_call.1} parent=47 // pred_check
          %p284 = pneg %p41
        $region50: #{tpu_custom_call.1} parent=47 // pred_check_branch
          %286 = sbr.rel (%p284) target = $region52
        $region51: #{tpu_custom_call.1} parent=47 // pred_region
          %s287 = sand.u32 %s31, 1
          %s288 = scalar_lea.sflag [#allocation3], %s287
          %s289 = sand.u32 %s31, 1
          %s290 = smul.addr %s289, 64
          %s291 = scalar_lea.vmem [#allocation2], %s290
          %s293 = ssub.s32 1024, 1024
          %294 = vsyncadd %s288, %s293
          %s295 = smul.addr %s21, 8
          %s296 = smul.addr %s295, 128
          %s297 = scalar_lea.hbm %s0, %s296
          %s298 = sshll.u32 %s291, 4
          %s299 = int_to_ptr.vmem [resolvable:$true] %s298
          %304 = dma.hbm_to_vmem [thread:$0]  %s297, 1024, %s299, %s288, 256, 256, 16
        $region52: #{tpu_custom_call.1} parent=47 // pred_fallthru
          _
      $region48: #{tpu_custom_call.1} parent=5 // pred_fallthru
        _
      %p305 = scmp.le.s32.totalorder 1, %s21
      %p306 = scmp.lt.s32.totalorder %s21, 5
      %p307 = pnand %p305, %p306
      %p308 = pneg %p307
      // Predicated region
      $region53: #{tpu_custom_call.1} parent=5 // pred_check
        _
      $region54: #{tpu_custom_call.1} parent=5 // pred_check_branch
        %310 = sbr.rel (%p307) target = $region56
      $region55: #{tpu_custom_call.1} parent=5 // pred_region
        %s311 = ssub.s32 %s21, 1
        %s312 = sand.u32 %s34, 1
        %s313 = scalar_lea.sflag [#allocation3], %s312
        %s314 = sand.u32 %s34, 1
        %s315 = smul.addr %s314, 64
        %s316 = scalar_lea.vmem [#allocation2], %s315
        // Predicated region
        $region57: #{tpu_custom_call.1} parent=55 // pred_check
          %p317 = pneg %p47
        $region58: #{tpu_custom_call.1} parent=55 // pred_check_branch
          %319 = sbr.rel (%p317) target = $region60
        $region59: #{tpu_custom_call.1} parent=55 // pred_region
          %320 = dma.done %s313, 1024
        $region60: #{tpu_custom_call.1} parent=55 // pred_fallthru
          _
        %s321 = sand.u32 %s34, 1
        %s322 = scalar_lea.sflag [#allocation3], %s321
        %s323 = sand.u32 %s34, 1
        %s324 = smul.addr %s323, 64
        %s325 = scalar_lea.vmem [#allocation2], %s324
        %p326 = pneg %p47
        %p327 = pneg %p44
        %p328 = pneg %p68
        %p329 = pneg %p65
        %p330 = pneg %p89
        %p331 = pneg %p86
        %p332 = pneg %p110
        %p333 = pneg %p107
        %p334 = pneg %p131
        %p335 = pneg %p128
        %p336 = pneg %p152
        %p337 = pneg %p149
        %p338 = pneg %p173
        %p339 = pneg %p170
        %p340 = pneg %p194
        %p341 = pneg %p191
        %p342 = pneg %p215
        %p343 = pneg %p212
        %p344 = pneg %p241
        %p345 = pneg %p238
        %s346 = sand.u32 %s228, 1
        %s347 = scalar_lea.sflag [#allocation4], %s346
        %s348 = sand.u32 %s228, 1
        %s349 = smul.addr %s348, 64
        %s350 = scalar_lea.vmem [#allocation5], %s349
        %v352 = vld [vmem:[%s316] sm:$0xff]
        %v353 = vld [vmem:[%s316 + $0x8] sm:$0xff]
        %v354 = vld [vmem:[%s316 + $0x10] sm:$0xff]
        %v355 = vld [vmem:[%s316 + $0x18] sm:$0xff]
        %v356 = vld [vmem:[%s316 + $0x20] sm:$0xff]
        %v357 = vld [vmem:[%s316 + $0x28] sm:$0xff]
        %v358 = vld [vmem:[%s316 + $0x30] sm:$0xff]
        %v359 = vld [vmem:[%s316 + $0x38] sm:$0xff]
        %v360 = vpack.c.bf16 %v354, %v352
        %v361 = vpack.c.bf16 %v355, %v353
        %v362 = vpack.c.bf16 %v358, %v356
        %v363 = vpack.c.bf16 %v359, %v357
        %v364 = vld [vmem:[%s1] sm:$0xf]
        %v365 = vld [vmem:[%s1 + $0x4] sm:$0xf]
        %v366 = vld [vmem:[%s1 + $0x8] sm:$0xf]
        %v367 = vld [vmem:[%s1 + $0xc] sm:$0xf]
        %v368 = vld [vmem:[%s2] sm:$0xff]
        %v369 = vld [vmem:[%s2 + $0x8] sm:$0xff]
        %v370 = vld [vmem:[%s2 + $0x10] sm:$0xff]
        %v371 = vld [vmem:[%s2 + $0x18] sm:$0xff]
        %373 = vset.pattern.permute.xlu0 0
        %374 = vperm.xlu0 %373, %v368
        %v375 = vpop.permute.xlu0 %374
        %378 = vset.pattern.permute.xlu0 0
        %379 = vperm.xlu0 %378, %v369
        %v380 = vpop.permute.xlu0 %379
        %383 = vset.pattern.permute.xlu0 0
        %384 = vperm.xlu0 %383, %v370
        %v385 = vpop.permute.xlu0 %384
        %388 = vset.pattern.permute.xlu0 0
        %389 = vperm.xlu0 %388, %v371
        %v390 = vpop.permute.xlu0 %389
        %v396 = vunpack.c.l.b16 %v364
        %v397 = vunpack.c.l.b16 %v365
        %v398 = vunpack.c.l.b16 %v366
        %v399 = vunpack.c.l.b16 %v367
        %v400 = vpack.c.b16 %v397, %v396
        %v401 = vpack.c.b16 %v399, %v398
        %vm402 = vcmask 261120
        %v404 = vsel %vm402, %v400, 0
        %v407 = vsel %vm402, %v401, 0
        %409 = vmatprep.subr.bf16.mxu0 0
        %410 = vmatpush1.bf16.msra.mxu0 0
        %411 = vmatprep.subr.bf16.mxu0 0
        %412 = vmatpush1.bf16.msra.mxu0 0
        %413 = vmatprep.subr.bf16.mxu0 0
        %414 = vmatpush1.bf16.msra.mxu0 0
        %415 = vmatprep.subr.bf16.mxu0 0
        %416 = vmatpush1.bf16.msra.mxu0 0
        %417 = vmatprep.subr.bf16.mxu0 0
        %418 = vmatpush1.bf16.msra.mxu0 0
        %419 = vmatprep.subr.bf16.mxu0 0
        %420 = vmatpush1.bf16.msra.mxu0 0
        %421 = vmatprep.subr.bf16.mxu0 %v363
        %422 = vmatpush1.bf16.msra.mxu0 %v362
        %423 = vmatprep.subr.bf16.mxu0 %v361
        %424 = vmatpush1.bf16.msra.mxu0 %v360
        %425 = vmatprep.subr.bf16.mxu0 0
        %426 = vmatpush2.bf16.msra.mxu0 0
        %427 = vmatprep.subr.bf16.mxu0 0
        %428 = vmatpush2.bf16.msra.mxu0 0
        %429 = vmatprep.subr.bf16.mxu0 0
        %430 = vmatpush2.bf16.msra.mxu0 0
        %431 = vmatprep.subr.bf16.mxu0 0
        %432 = vmatpush2.bf16.msra.mxu0 0
        %433 = vmatprep.subr.bf16.mxu0 0
        %434 = vmatpush2.bf16.msra.mxu0 0
        %435 = vmatprep.subr.bf16.mxu0 0
        %436 = vmatpush2.bf16.msra.mxu0 0
        %437 = vmatprep.subr.bf16.mxu0 0
        %438 = vmatpush2.bf16.msra.mxu0 0
        %439 = vmatprep.subr.bf16.mxu0 0
        %440 = vmatpush2.bf16.msra.mxu0 0
        %441 = vmatprep.mubr.bf16.mxu0 0
        %442 = vmatmul.mubr.bf16.gmra.mxu0 %v404
        %v443 = vpop.f32.mrf.mxu0
        %v444 = vadd.f32 %v375, %v443
        %v445 = vpop.f32.mrf.mxu0
        %v446 = vadd.f32 %v375, %v445
        %v447 = vpop.f32.mrf.mxu0
        %v448 = vadd.f32 %v380, %v447
        %v449 = vpop.f32.mrf.mxu0
        %v450 = vadd.f32 %v380, %v449
        %451 = vmatprep.mubr.bf16.mxu0 0
        %452 = vmatmul.mubr.bf16.gmra.mxu0 %v407
        %v453 = vpop.f32.mrf.mxu0
        %v454 = vadd.f32 %v385, %v453
        %v455 = vpop.f32.mrf.mxu0
        %v456 = vadd.f32 %v385, %v455
        %v457 = vpop.f32.mrf.mxu0
        %v458 = vadd.f32 %v390, %v457
        %v459 = vpop.f32.mrf.mxu0
        %v460 = vadd.f32 %v390, %v459
        %461 = vdwg.mxu0
        %v462 = vmax.f32 %v444, 0.0
        %v463 = vmax.f32 %v446, 0.0
        %v464 = vmax.f32 %v448, 0.0
        %v465 = vmax.f32 %v450, 0.0
        %v466 = vmax.f32 %v454, 0.0
        %v467 = vmax.f32 %v456, 0.0
        %v468 = vmax.f32 %v458, 0.0
        %v469 = vmax.f32 %v460, 0.0
        %v470 = vld [vmem:[%s3] sm:$0xf]
        %v471 = vld [vmem:[%s3 + $0x4] sm:$0xf]
        %v472 = vld [vmem:[%s3 + $0x8] sm:$0xf]
        %v473 = vld [vmem:[%s3 + $0xc] sm:$0xf]
        %v474 = vpack.c.bf16 %v464, %v462
        %v475 = vpack.c.bf16 %v465, %v463
        %v476 = vpack.c.bf16 %v468, %v466
        %v477 = vpack.c.bf16 %v469, %v467
        %v478 = vld [vmem:[%s4] sm:$0xff]
        %v479 = vld [vmem:[%s4 + $0x8] sm:$0xff]
        %v480 = vld [vmem:[%s4 + $0x10] sm:$0xff]
        %v481 = vld [vmem:[%s4 + $0x18] sm:$0xff]
        %483 = vset.pattern.permute.xlu0 0
        %484 = vperm.xlu0 %483, %v478
        %v485 = vpop.permute.xlu0 %484
        %488 = vset.pattern.permute.xlu0 0
        %489 = vperm.xlu0 %488, %v479
        %v490 = vpop.permute.xlu0 %489
        %493 = vset.pattern.permute.xlu0 0
        %494 = vperm.xlu0 %493, %v480
        %v495 = vpop.permute.xlu0 %494
        %498 = vset.pattern.permute.xlu0 0
        %499 = vperm.xlu0 %498, %v481
        %v500 = vpop.permute.xlu0 %499
        %v506 = vunpack.c.l.b16 %v470
        %v507 = vunpack.c.l.b16 %v471
        %v508 = vunpack.c.l.b16 %v472
        %v509 = vunpack.c.l.b16 %v473
        %v510 = vpack.c.b16 %v507, %v506
        %v511 = vpack.c.b16 %v509, %v508
        %v513 = vsel %vm402, %v510, 0
        %v516 = vsel %vm402, %v511, 0
        %518 = vmatprep.subr.bf16.mxu0 0
        %519 = vmatpush1.bf16.msra.mxu0 0
        %520 = vmatprep.subr.bf16.mxu0 0
        %521 = vmatpush1.bf16.msra.mxu0 0
        %522 = vmatprep.subr.bf16.mxu0 0
        %523 = vmatpush1.bf16.msra.mxu0 0
        %524 = vmatprep.subr.bf16.mxu0 0
        %525 = vmatpush1.bf16.msra.mxu0 0
        %526 = vmatprep.subr.bf16.mxu0 0
        %527 = vmatpush1.bf16.msra.mxu0 0
        %528 = vmatprep.subr.bf16.mxu0 0
        %529 = vmatpush1.bf16.msra.mxu0 0
        %530 = vmatprep.subr.bf16.mxu0 %v477
        %531 = vmatpush1.bf16.msra.mxu0 %v476
        %532 = vmatprep.subr.bf16.mxu0 %v475
        %533 = vmatpush1.bf16.msra.mxu0 %v474
        %534 = vmatprep.subr.bf16.mxu0 0
        %535 = vmatpush2.bf16.msra.mxu0 0
        %536 = vmatprep.subr.bf16.mxu0 0
        %537 = vmatpush2.bf16.msra.mxu0 0
        %538 = vmatprep.subr.bf16.mxu0 0
        %539 = vmatpush2.bf16.msra.mxu0 0
        %540 = vmatprep.subr.bf16.mxu0 0
        %541 = vmatpush2.bf16.msra.mxu0 0
        %542 = vmatprep.subr.bf16.mxu0 0
        %543 = vmatpush2.bf16.msra.mxu0 0
        %544 = vmatprep.subr.bf16.mxu0 0
        %545 = vmatpush2.bf16.msra.mxu0 0
        %546 = vmatprep.subr.bf16.mxu0 0
        %547 = vmatpush2.bf16.msra.mxu0 0
        %548 = vmatprep.subr.bf16.mxu0 0
        %549 = vmatpush2.bf16.msra.mxu0 0
        %550 = vmatprep.mubr.bf16.mxu0 0
        %551 = vmatmul.mubr.bf16.gmra.mxu0 %v513
        %v552 = vpop.f32.mrf.mxu0
        %v553 = vadd.f32 %v485, %v552
        %v554 = vpop.f32.mrf.mxu0
        %v555 = vadd.f32 %v485, %v554
        %v556 = vpop.f32.mrf.mxu0
        %v557 = vadd.f32 %v490, %v556
        %v558 = vpop.f32.mrf.mxu0
        %v559 = vadd.f32 %v490, %v558
        %560 = vmatprep.mubr.bf16.mxu0 0
        %561 = vmatmul.mubr.bf16.gmra.mxu0 %v516
        %v562 = vpop.f32.mrf.mxu0
        %v563 = vadd.f32 %v495, %v562
        %v564 = vpop.f32.mrf.mxu0
        %v565 = vadd.f32 %v495, %v564
        %v566 = vpop.f32.mrf.mxu0
        %v567 = vadd.f32 %v500, %v566
        %v568 = vpop.f32.mrf.mxu0
        %v569 = vadd.f32 %v500, %v568
        %570 = vdwg.mxu0
        %v571 = vadd.f32 %v553, %v555
        %572 = vadd.xlane.f32.xlu0 %v571
        %v573 = vpop.xlane.xlu0 %572
        %v574 = vadd.f32 %v557, %v559
        %575 = vadd.xlane.f32.xlu0 %v574
        %v576 = vpop.xlane.xlu0 %575
        %v577 = vadd.f32 %v563, %v565
        %578 = vadd.xlane.f32.xlu0 %v577
        %v579 = vpop.xlane.xlu0 %578
        %v580 = vadd.f32 %v567, %v569
        %581 = vadd.xlane.f32.xlu0 %v580
        %v582 = vpop.xlane.xlu0 %581
        %v583 = vmul.f32 %v573, 0.00390625
        %v584 = vmul.f32 %v576, 0.00390625
        %v585 = vmul.f32 %v579, 0.00390625
        %v586 = vmul.f32 %v582, 0.00390625
        %v587 = vld [vmem:[%s5] sm:$0xf]
        %v588 = vpack.c.bf16 %v584, %v583
        %v589 = vpack.c.bf16 %v586, %v585
        %v590 = vld [vmem:[%s6] sm:$0xff]
        %v592 = vsel %vm402, %v587, 0
        %594 = vmatprep.subr.bf16.mxu0 0
        %595 = vmatpush1.bf16.msra.mxu0 0
        %596 = vmatprep.subr.bf16.mxu0 0
        %597 = vmatpush1.bf16.msra.mxu0 0
        %598 = vmatprep.subr.bf16.mxu0 0
        %599 = vmatpush1.bf16.msra.mxu0 0
        %600 = vmatprep.subr.bf16.mxu0 0
        %601 = vmatpush1.bf16.msra.mxu0 0
        %602 = vmatprep.subr.bf16.mxu0 0
        %603 = vmatpush1.bf16.msra.mxu0 0
        %604 = vmatprep.subr.bf16.mxu0 0
        %605 = vmatpush1.bf16.msra.mxu0 0
        %606 = vmatprep.subr.bf16.mxu0 0
        %607 = vmatpush1.bf16.msra.mxu0 %v589
        %608 = vmatprep.subr.bf16.mxu0 0
        %609 = vmatpush1.bf16.msra.mxu0 %v588
        %610 = vmatprep.subr.bf16.mxu0 0
        %611 = vmatpush2.bf16.msra.mxu0 0
        %612 = vmatprep.subr.bf16.mxu0 0
        %613 = vmatpush2.bf16.msra.mxu0 0
        %614 = vmatprep.subr.bf16.mxu0 0
        %615 = vmatpush2.bf16.msra.mxu0 0
        %616 = vmatprep.subr.bf16.mxu0 0
        %617 = vmatpush2.bf16.msra.mxu0 0
        %618 = vmatprep.subr.bf16.mxu0 0
        %619 = vmatpush2.bf16.msra.mxu0 0
        %620 = vmatprep.subr.bf16.mxu0 0
        %621 = vmatpush2.bf16.msra.mxu0 0
        %622 = vmatprep.subr.bf16.mxu0 0
        %623 = vmatpush2.bf16.msra.mxu0 0
        %624 = vmatprep.subr.bf16.mxu0 0
        %625 = vmatpush2.bf16.msra.mxu0 0
        %626 = vmatprep.mubr.bf16.mxu0 0
        %627 = vmatmul.mubr.bf16.gmra.mxu0 %v592
        %v628 = vpop.f32.mrf.mxu0
        %v629 = vadd.f32 %v590, %v628
        %v630 = vpop.f32.mrf.mxu0
        %v631 = vpop.f32.mrf.mxu0
        %v632 = vpop.f32.mrf.mxu0
        %633 = vdwg.mxu0
        %v634 = vmax.f32 %v629, 0.0
        %v635 = vld [vmem:[%s7] sm:$0xf]
        %v636 = vld [vmem:[%s7 + $0x4] sm:$0xf]
        %v637 = vld [vmem:[%s7 + $0x8] sm:$0xf]
        %v638 = vld [vmem:[%s7 + $0xc] sm:$0xf]
        %v639 = vpack.c.bf16 %v634, %v634
        %v640 = vld [vmem:[%s8] sm:$0xff]
        %v641 = vld [vmem:[%s8 + $0x8] sm:$0xff]
        %v642 = vld [vmem:[%s8 + $0x10] sm:$0xff]
        %v643 = vld [vmem:[%s8 + $0x18] sm:$0xff]
        %v648 = vunpack.c.l.b16 %v635
        %v649 = vunpack.c.l.b16 %v636
        %v650 = vunpack.c.l.b16 %v637
        %v651 = vunpack.c.l.b16 %v638
        %v652 = vpack.c.b16 %v649, %v648
        %v653 = vpack.c.b16 %v651, %v650
        %vm654 = vcmask 64512
        %v656 = vsel %vm654, %v652, 0
        %v659 = vsel %vm654, %v653, 0
        %vm661 = vcmask 1043456
        %v663 = vsel %vm661, %v639, 0
        %665 = vmatprep.subr.bf16.mxu0 0
        %666 = vmatpush1.bf16.msra.mxu0 0
        %667 = vmatprep.subr.bf16.mxu0 0
        %668 = vmatpush1.bf16.msra.mxu0 0
        %669 = vmatprep.subr.bf16.mxu0 0
        %670 = vmatpush1.bf16.msra.mxu0 0
        %671 = vmatprep.subr.bf16.mxu0 0
        %672 = vmatpush1.bf16.msra.mxu0 0
        %673 = vmatprep.subr.bf16.mxu0 0
        %674 = vmatpush1.bf16.msra.mxu0 0
        %675 = vmatprep.subr.bf16.mxu0 0
        %676 = vmatpush1.bf16.msra.mxu0 0
        %677 = vmatprep.subr.bf16.mxu0 0
        %678 = vmatpush1.bf16.msra.mxu0 0
        %679 = vmatprep.subr.bf16.mxu0 0
        %680 = vmatpush1.bf16.msra.mxu0 %v663
        %681 = vmatprep.subr.bf16.mxu0 0
        %682 = vmatpush2.bf16.msra.mxu0 0
        %683 = vmatprep.subr.bf16.mxu0 0
        %684 = vmatpush2.bf16.msra.mxu0 0
        %685 = vmatprep.subr.bf16.mxu0 0
        %686 = vmatpush2.bf16.msra.mxu0 0
        %687 = vmatprep.subr.bf16.mxu0 0
        %688 = vmatpush2.bf16.msra.mxu0 0
        %689 = vmatprep.subr.bf16.mxu0 0
        %690 = vmatpush2.bf16.msra.mxu0 0
        %691 = vmatprep.subr.bf16.mxu0 0
        %692 = vmatpush2.bf16.msra.mxu0 0
        %693 = vmatprep.subr.bf16.mxu0 0
        %694 = vmatpush2.bf16.msra.mxu0 0
        %695 = vmatprep.subr.bf16.mxu0 0
        %696 = vmatpush2.bf16.msra.mxu0 0
        %697 = vmatprep.mubr.bf16.mxu0 0
        %698 = vmatmul.mubr.bf16.gmra.mxu0 %v656
        %v699 = vpop.f32.mrf.mxu0
        %v700 = vadd.f32 %v640, %v699
        %v701 = vpop.f32.mrf.mxu0
        %v702 = vpop.f32.mrf.mxu0
        %v703 = vadd.f32 %v641, %v702
        %v704 = vpop.f32.mrf.mxu0
        %705 = vmatprep.mubr.bf16.mxu0 0
        %706 = vmatmul.mubr.bf16.gmra.mxu0 %v659
        %v707 = vpop.f32.mrf.mxu0
        %v708 = vadd.f32 %v642, %v707
        %v709 = vpop.f32.mrf.mxu0
        %v710 = vpop.f32.mrf.mxu0
        %v711 = vadd.f32 %v643, %v710
        %v712 = vpop.f32.mrf.mxu0
        %713 = vdwg.mxu0
        %v714 = vxor.u32 %v700, 2147483648
        %v715 = vxor.u32 %v703, 2147483648
        %v716 = vxor.u32 %v708, 2147483648
        %v717 = vxor.u32 %v711, 2147483648
        %v718 = vmul.f32 %v714, 1.442695
        %v719 = vpow.pop %v718
        %v720 = vmul.f32 %v715, 1.442695
        %v721 = vpow.pop %v720
        %v722 = vmul.f32 %v716, 1.442695
        %v723 = vpow.pop %v722
        %v724 = vmul.f32 %v717, 1.442695
        %v725 = vpow.pop %v724
        %v726 = vadd.f32 %v719, 1.0
        %v727 = vadd.f32 %v721, 1.0
        %v728 = vadd.f32 %v723, 1.0
        %v729 = vadd.f32 %v725, 1.0
        %v730 = vrcp.pop %v726
        %v731 = vmul.f32 1.0, %v730
        %v732 = vrcp.pop %v727
        %v733 = vmul.f32 1.0, %v732
        %v734 = vrcp.pop %v728
        %v735 = vmul.f32 1.0, %v734
        %v736 = vrcp.pop %v729
        %v737 = vmul.f32 1.0, %v736
        %739 = vset.pattern.permute.xlu0 0
        %740 = vperm.xlu0 %739, %v731
        %v741 = vpop.permute.xlu0 %740
        %744 = vset.pattern.permute.xlu0 0
        %745 = vperm.xlu0 %744, %v733
        %v746 = vpop.permute.xlu0 %745
        %749 = vset.pattern.permute.xlu0 0
        %750 = vperm.xlu0 %749, %v735
        %v751 = vpop.permute.xlu0 %750
        %754 = vset.pattern.permute.xlu0 0
        %755 = vperm.xlu0 %754, %v737
        %v756 = vpop.permute.xlu0 %755
        %v758 = vmul.f32 %v553, %v741
        %v759 = vmul.f32 %v555, %v741
        %v760 = vmul.f32 %v557, %v746
        %v761 = vmul.f32 %v559, %v746
        %v762 = vmul.f32 %v563, %v751
        %v763 = vmul.f32 %v565, %v751
        %v764 = vmul.f32 %v567, %v756
        %v765 = vmul.f32 %v569, %v756
        %v766 = vadd.f32 %v758, %v352
        %v767 = vadd.f32 %v759, %v353
        %v768 = vadd.f32 %v760, %v354
        %v769 = vadd.f32 %v761, %v355
        %v770 = vadd.f32 %v762, %v356
        %v771 = vadd.f32 %v763, %v357
        %v772 = vadd.f32 %v764, %v358
        %v773 = vadd.f32 %v765, %v359
        %v774 = vmax.f32 %v766, 0.0
        %v775 = vmax.f32 %v767, 0.0
        %v776 = vmax.f32 %v768, 0.0
        %v777 = vmax.f32 %v769, 0.0
        %v778 = vmax.f32 %v770, 0.0
        %v779 = vmax.f32 %v771, 0.0
        %v780 = vmax.f32 %v772, 0.0
        %v781 = vmax.f32 %v773, 0.0
        %782 = vst [vmem:[%s350] sm:$0xff] %v774
        %783 = vst [vmem:[%s350 + $0x8] sm:$0xff] %v775
        %784 = vst [vmem:[%s350 + $0x10] sm:$0xff] %v776
        %785 = vst [vmem:[%s350 + $0x18] sm:$0xff] %v777
        %786 = vst [vmem:[%s350 + $0x20] sm:$0xff] %v778
        %787 = vst [vmem:[%s350 + $0x28] sm:$0xff] %v779
        %788 = vst [vmem:[%s350 + $0x30] sm:$0xff] %v780
        %789 = vst [vmem:[%s350 + $0x38] sm:$0xff] %v781
        %s790 = sand.u32 %s228, 1
        %s791 = scalar_lea.sflag [#allocation4], %s790
        %s792 = sand.u32 %s228, 1
        %s793 = smul.addr %s792, 64
        %s794 = scalar_lea.vmem [#allocation5], %s793
        // Predicated region
        $region61: #{tpu_custom_call.1} parent=55 // pred_check
          %p795 = pneg %p238
        $region62: #{tpu_custom_call.1} parent=55 // pred_check_branch
          %797 = sbr.rel (%p795) target = $region64
        $region63: #{tpu_custom_call.1} parent=55 // pred_region
          %s799 = ssub.s32 1024, 1024
          %800 = vsyncadd %s791, %s799
          %s801 = smul.addr %s26, 8
          %s802 = smul.addr %s801, 128
          %s803 = scalar_lea.hbm %s9, %s802
          %s804 = sshll.u32 %s794, 4
          %s805 = int_to_ptr.vmem [resolvable:$true] %s804
          %810 = dma.vmem_to_hbm [thread:$0]  %s805, 1024, %s803, %s791, 256, 256, 16
        $region64: #{tpu_custom_call.1} parent=55 // pred_fallthru
          _
      $region56: #{tpu_custom_call.1} parent=5 // pred_fallthru
        _
      %p811 = scmp.le.s32.totalorder 2, %s21
      // Predicated region
      $region65: #{tpu_custom_call.1} parent=5 // pred_check
        %p812 = pneg %p811
      $region66: #{tpu_custom_call.1} parent=5 // pred_check_branch
        %814 = sbr.rel (%p812) target = $region68
      $region67: #{tpu_custom_call.1} parent=5 // pred_region
        %s815 = ssub.s32 %s21, 2
        // Predicated region
        $region69: #{tpu_custom_call.1} parent=67 // pred_check
          %p816 = pneg %p244
        $region70: #{tpu_custom_call.1} parent=67 // pred_check_branch
          %818 = sbr.rel (%p816) target = $region72
        $region71: #{tpu_custom_call.1} parent=67 // pred_region
          %s819 = sand.u32 %s229, 1
          %s820 = scalar_lea.sflag [#allocation4], %s819
          %s821 = sand.u32 %s229, 1
          %s822 = smul.addr %s821, 64
          %s823 = scalar_lea.vmem [#allocation5], %s822
          %824 = dma.done %s820, 1024
        $region72: #{tpu_custom_call.1} parent=67 // pred_fallthru
          _
      $region68: #{tpu_custom_call.1} parent=5 // pred_fallthru
        _
    $region6: #{tpu_custom_call.1} parent=1 // loop_footer
      %s25 = sadd.s32 1, %s21
    $region7: #{tpu_custom_call.1} parent=1 // loop_footer_branch
      %20 = sbr.rel target = $region3
    $region8: #{tpu_custom_call.1} parent=1 // loop_exit
      _
    %825 = vsyncpa [#allocation3], 1
    %s826 = scalar_lea.sflag [#allocation3], 1
    %827 = vsyncpa %s826, 1
    %828 = vsyncpa [#allocation4], 1
    %s829 = scalar_lea.sflag [#allocation4], 1
    %830 = vsyncpa %s829, 1

</llo_original>
